<compile_context>
chip_gen: v5e
topology: v5e:2x2
jax: 0.10.0
libtpu: 0.0.40
codegen_flags: <defaults>
</compile_context>

<pallas_src>
import functools

import jax
import jax.numpy as jnp
from jax.experimental import pallas as pl
from jax.experimental.pallas import tpu as pltpu

_LANE = 128


def _round_up(a, b):
    return -(-a // b) * b


def _device_kind():
    try:
        return jax.devices()[0].device_kind.lower()
    except Exception:
        return ""


def _num_tensorcores(kind):
    # v7x has 2 TensorCores per chip; v5e/v6e have 1.
    return 2 if "v7" in kind else 1


def _bf16_compute_ok(kind):
    # v6e/v7x have bf16-capable VPU/EUP; v5e does not.
    return ("v6" in kind) or ("v7" in kind)


def _sublane_for(dtype):
    itemsize = jnp.dtype(dtype).itemsize
    if itemsize >= 4:
        return 8
    if itemsize == 2:
        return 16
    return 32


def _pow_static(x, p):
    """x ** p for x > 0 with a trace-time-constant p.

    Integer p in [1, 16] lowers to VPU multiplies (exponentiation by
    squaring); anything else falls back to jnp.power with a constant exponent.
    """
    # TODO(synk): half-integer static p could route through sqrt/rsqrt; not needed for p=3.
    pf = float(p)
    if pf.is_integer() and 1 <= int(pf) <= 16:
        n = int(pf)
        result = None
        base = x
        while n > 0:
            if n & 1:
                result = base if result is None else result * base
            n >>= 1
            if n:
                base = base * base
        return result
    return jnp.power(x, pf)


def _gem_kernel(*refs, eps, hw_true, hw_block, acc_width, static_p, compute_dtype):
    # refs (traced p): p_ref(SMEM (1,)), x_ref, o_ref, acc_ref
    # refs (static p):                   x_ref, o_ref, acc_ref
    if static_p is None:
        p_ref, x_ref, o_ref, acc_ref = refs
    else:
        x_ref, o_ref, acc_ref = refs

    k = pl.program_id(1)

    @pl.when(k == 0)
    def _init():
        acc_ref[...] = jnp.zeros_like(acc_ref)

    x = x_ref[...]
    if x.dtype != compute_dtype:
        x = x.astype(compute_dtype)
    x = jnp.maximum(x, jnp.asarray(eps, compute_dtype))          # clamp(min=eps)

    if static_p is None:
        p = p_ref[0]
        xp = jnp.power(x, p.astype(compute_dtype))               # x ** p (x > 0)
        inv_p = 1.0 / p
    else:
        xp = _pow_static(x, static_p)                            # VPU multiplies
        inv_p = 1.0 / float(static_p)
    xp = xp.astype(jnp.float32)

    def _accum(vals):
        if acc_width == 1:
            acc_ref[...] += jnp.sum(vals, axis=-1, keepdims=True)
        else:
            # Fold 128-lane groups with plain VPU adds: no per-step XLU
            # cross-lane reduce, no narrow masked store.
            total = acc_ref[...]
            for g in range(hw_block // _LANE):
                total = total + vals[:, g * _LANE:(g + 1) * _LANE]
            acc_ref[...] = total

    if hw_true % hw_block == 0:
        # Every chunk is full: no mask code on the hot path at all.
        _accum(xp)
    else:
        needs_mask = (k + 1) * hw_block > hw_true

        @pl.when(jnp.logical_not(needs_mask))
        def _interior():
            _accum(xp)

        @pl.when(needs_mask)
        def _tail():
            lane = jax.lax.broadcasted_iota(jnp.int32, xp.shape, 1)
            valid = (k * hw_block + lane) < hw_true
            _accum(jnp.where(valid, xp, 0.0))

    @pl.when(k == pl.num_programs(1) - 1)
    def _finalize():
        total = jnp.sum(acc_ref[...], axis=-1, keepdims=True)    # (block_rows, 1)
        mean = total * (1.0 / hw_true)                           # global avg pool
        o_ref[...] = jnp.power(mean, inv_p).astype(o_ref.dtype)  # ** (1/p)


def _choose_tiles(rows, hw, dtype_bytes, sublane, n_cores,
                  target_tile_bytes, max_hw_block):
    # Lane (reduction) axis: whole H*W if it fits a block, else 128-aligned chunks.
    hw_block = hw if hw <= max_hw_block else max_hw_block
    # Physical per-row VMEM footprint: lanes pad to a multiple of 128.
    row_bytes = _round_up(hw_block, _LANE) * dtype_bytes

    rows_ceil = _round_up(rows, sublane)
    block_rows = max(sublane, (target_tile_bytes // row_bytes) // sublane * sublane)
    block_rows = min(block_rows, rows_ceil)

    # v7x only: split the row axis into balanced shards for the 2 TensorCores.
    if n_cores >= 2 and block_rows == rows_ceil and rows_ceil >= n_cores * sublane:
        block_rows = _round_up(-(-rows // n_cores), sublane)
    return block_rows, hw_block


def gem(x, p=3.0, eps=1e-6, *, target_tile_bytes=8 << 20, max_hw_block=8192):
    """GeM pooling. x: (N, C, H, W) -> (N, C, 1, 1).

    `p` may be a Python int/float (static fast path, frozen inference) or a
    shape-(1,) array (learnable parameter, traced through SMEM).
    """
    N, C, H, W = x.shape
    rows, hw = N * C, H * W
    dtype_bytes = jnp.dtype(x.dtype).itemsize
    kind = _device_kind()
    sublane = _sublane_for(x.dtype)
    n_cores = _num_tensorcores(kind)

    block_rows, hw_block = _choose_tiles(
        rows, hw, dtype_bytes, sublane, n_cores, target_tile_bytes, max_hw_block)
    acc_width = _LANE if hw_block % _LANE == 0 else 1

    # bf16 clamp/pow only where VPU/EUP are bf16-capable; accumulation stays f32.
    if x.dtype == jnp.bfloat16 and _bf16_compute_ok(kind):
        compute_dtype = jnp.bfloat16
    else:
        compute_dtype = jnp.float32

    static_p = None
    if isinstance(p, (int, float)) and not isinstance(p, bool):
        static_p = float(p)

    xf = x.reshape(rows, hw)                       # contiguous reshape, no pad
    grid = (pl.cdiv(rows, block_rows), pl.cdiv(hw, hw_block))

    operands = []
    in_specs = []
    if static_p is None:
        operands.append(jnp.asarray(p, jnp.float32).reshape((1,)))
        in_specs.append(pl.BlockSpec(memory_space=pltpu.MemorySpace.SMEM))
    operands.append(xf)
    in_specs.append(pl.BlockSpec((block_rows, hw_block), lambda i, k: (i, k)))

    # Scoped VMEM from the *physical* (lane-padded) footprint, double-buffered.
    in_tile = block_rows * _round_up(hw_block, _LANE) * dtype_bytes
    out_tile = block_rows * _LANE * dtype_bytes
    acc_bytes = block_rows * _LANE * 4
    vmem_limit = 2 * in_tile + 2 * out_tile + acc_bytes + (4 << 20)
    vmem_limit = int(min(max(vmem_limit, 24 << 20), 48 << 20))

    int_static = static_p is not None and float(static_p).is_integer()
    cost = pl.CostEstimate(
        flops=4 * rows * hw,
        transcendentals=(2 * rows) if int_static else (2 * rows * hw + 2 * rows),
        bytes_accessed=rows * hw * dtype_bytes + rows * dtype_bytes,
    )

    kernel = functools.partial(
        _gem_kernel, eps=float(eps), hw_true=hw, hw_block=hw_block,
        acc_width=acc_width, static_p=static_p, compute_dtype=compute_dtype)

    out = pl.pallas_call(
        kernel,
        out_shape=jax.ShapeDtypeStruct((rows, 1), x.dtype),
        grid=grid,
        in_specs=in_specs,
        out_specs=pl.BlockSpec((block_rows, 1), lambda i, k: (i, 0)),
        scratch_shapes=[pltpu.VMEM((block_rows, acc_width), jnp.float32)],
        compiler_params=pltpu.CompilerParams(
            dimension_semantics=("parallel", "arbitrary"),
            vmem_limit_bytes=vmem_limit,
        ),
        cost_estimate=cost,
    )(*operands)

    return out.reshape(N, C, 1, 1)


def _ref_gem(x, p, eps):
    xc = jnp.maximum(x, eps)
    return jnp.mean(xc ** p, axis=(-2, -1), keepdims=True) ** (1.0 / p)


if __name__ == "__main__":
    key = jax.random.PRNGKey(0)
    N, C, H, W = 2, 4, 16, 16
    x = jax.random.normal(key, (N, C, H, W), dtype=jnp.float32)
    eps = 1e-6

    # 1) Static-p fast path (p frozen at 3, the common inference case).
    y_static = gem(x, 3.0, eps=eps)
    jax.block_until_ready(y_static)
    ref = _ref_gem(x, 3.0, eps)
    assert y_static.shape == (N, C, 1, 1), y_static.shape
    assert jnp.allclose(y_static, ref, rtol=1e-5, atol=1e-6)

    # 2) Traced learnable p (nn.Parameter(torch.ones(1) * 3) semantics).
    p_param = jnp.ones((1,), dtype=jnp.float32) * 3.0
    y_traced = gem(x, p_param, eps=eps)
    jax.block_until_ready(y_traced)
    assert jnp.allclose(y_traced, ref, rtol=1e-4, atol=1e-5)

    # 3) Non-divisible shapes: multi-chunk reduction with a masked lane tail
    #    and a partial row block (no host-side padding anywhere).
    x2 = jax.random.normal(jax.random.PRNGKey(1), (2, 3, 15, 20), dtype=jnp.float32)
    y2 = gem(x2, 3.0, eps=eps, max_hw_block=128)
    jax.block_until_ready(y2)
    ref2 = _ref_gem(x2, 3.0, eps)
    assert y2.shape == (2, 3, 1, 1), y2.shape
    assert jnp.allclose(y2, ref2, rtol=1e-5, atol=1e-6)

    print("KERNEL_OK")
</pallas_src>

<mosaic_0001>
module attributes {stable_mosaic.version = 11 : i64} {
  func.func @_gem_kernel(%arg0: i32, %arg1: i32, %arg2: memref<8x256xf32, #tpu.memory_space<vmem>>, %arg3: memref<8x1xf32, #tpu.memory_space<vmem>>, %arg4: memref<8x128xf32, #tpu.memory_space<vmem>>) attributes {dimension_semantics = [#tpu.dimension_semantics<parallel>, #tpu.dimension_semantics<arbitrary>], iteration_bounds = array<i64: 1, 1>, scalar_prefetch = 0 : i64, scratch_operands = 1 : i64, tpu.core_type = #tpu.core_type<tc>, window_params = [{transform_indices = @transform_0, window_bounds = array<i64: 8, 256>}, {transform_indices = @transform_1, window_bounds = array<i64: 8, 1>}]} {
    %c0_i32 = arith.constant 0 : i32
    %0 = arith.cmpi eq, %arg1, %c0_i32 : i32
    %1 = arith.extui %0 : i1 to i32
    %c0_i32_0 = arith.constant 0 : i32
    %2 = arith.cmpi ne, %1, %c0_i32_0 : i32
    scf.if %2 {
      %cst_8 = arith.constant 0.000000e+00 : f32
      %17 = vector.broadcast %cst_8 : f32 to vector<8x128xf32>
      %c0_9 = arith.constant 0 : index
      %c0_10 = arith.constant 0 : index
      %18 = vector.load %arg4[%c0_9, %c0_10] : memref<8x128xf32, #tpu.memory_space<vmem>>, vector<8x128xf32>
      tpu.vector_store %arg4[%c0_9, %c0_10], %17 {strides = array<i32>} : memref<8x128xf32, #tpu.memory_space<vmem>>, vector<8x128xf32>,
    } else {
    }
    %c0 = arith.constant 0 : index
    %c0_1 = arith.constant 0 : index
    %3 = vector.load %arg2[%c0, %c0_1] : memref<8x256xf32, #tpu.memory_space<vmem>>, vector<8x256xf32>
    %cst = arith.constant 9.99999997E-7 : f32
    %4 = vector.broadcast %cst : f32 to vector<8x256xf32>
    %5 = arith.maximumf %3, %4 : vector<8x256xf32>
    %6 = arith.mulf %5, %5 : vector<8x256xf32>
    %7 = arith.mulf %5, %6 : vector<8x256xf32>
    %c0_2 = arith.constant 0 : index
    %c0_3 = arith.constant 0 : index
    %8 = vector.load %arg4[%c0_2, %c0_3] : memref<8x128xf32, #tpu.memory_space<vmem>>, vector<8x128xf32>
    %9 = vector.extract_strided_slice %7 {offsets = [0, 0], sizes = [8, 128], strides = [1, 1]} : vector<8x256xf32> to vector<8x128xf32>
    %10 = arith.addf %8, %9 : vector<8x128xf32>
    %11 = vector.extract_strided_slice %7 {offsets = [0, 128], sizes = [8, 128], strides = [1, 1]} : vector<8x256xf32> to vector<8x128xf32>
    %12 = arith.addf %10, %11 : vector<8x128xf32>
    %c0_4 = arith.constant 0 : index
    %c0_5 = arith.constant 0 : index
    %13 = vector.load %arg4[%c0_4, %c0_5] : memref<8x128xf32, #tpu.memory_space<vmem>>, vector<8x128xf32>
    tpu.vector_store %arg4[%c0_4, %c0_5], %12 {strides = array<i32>} : memref<8x128xf32, #tpu.memory_space<vmem>>, vector<8x128xf32>,
    %c0_i32_6 = arith.constant 0 : i32
    %14 = arith.cmpi eq, %arg1, %c0_i32_6 : i32
    %15 = arith.extui %14 : i1 to i32
    %c0_i32_7 = arith.constant 0 : i32
    %16 = arith.cmpi ne, %15, %c0_i32_7 : i32
    scf.if %16 {
      %c0_8 = arith.constant 0 : index
      %c0_9 = arith.constant 0 : index
      %17 = vector.load %arg4[%c0_8, %c0_9] : memref<8x128xf32, #tpu.memory_space<vmem>>, vector<8x128xf32>
      %cst_10 = arith.constant dense<0.000000e+00> : vector<8xf32>
      %18 = vector.multi_reduction <add>, %17, %cst_10 [1] : vector<8x128xf32> to vector<8xf32>
      %19 = vector.shape_cast %18 : vector<8xf32> to vector<8x1xf32>
      %cst_11 = arith.constant 3.906250e-03 : f32
      %20 = vector.broadcast %cst_11 : f32 to vector<8x1xf32>
      %21 = arith.mulf %19, %20 : vector<8x1xf32>
      %cst_12 = arith.constant 0.333333343 : f32
      %22 = vector.broadcast %cst_12 : f32 to vector<8x1xf32>
      %23 = math.powf %21, %22 : vector<8x1xf32>
      %c0_13 = arith.constant 0 : index
      %c0_14 = arith.constant 0 : index
      %24 = vector.load %arg3[%c0_13, %c0_14] : memref<8x1xf32, #tpu.memory_space<vmem>>, vector<8x1xf32>
      tpu.vector_store %arg3[%c0_13, %c0_14], %23 {strides = array<i32>} : memref<8x1xf32, #tpu.memory_space<vmem>>, vector<8x1xf32>,
    } else {
    }
    return
  }
  func.func @transform_0(%arg0: i32, %arg1: i32) -> (i32, i32) {
    %c0_i32 = arith.constant 0 : i32
    return %arg0, %arg1 : i32, i32
  }
  func.func @transform_1(%arg0: i32, %arg1: i32) -> (i32, i32) {
    %c0_i32 = arith.constant 0 : i32
    %c0_i32_0 = arith.constant 0 : i32
    return %arg0, %c0_i32 : i32, i32
  }
}

</mosaic_0001>

<llo_original>
// kernel: tpu_custom_call.1
$region0: #{tpu_custom_call.1}
  #allocation0 [shape = 'u32[]', space=smem, size = 0x4, offset = 0x4, fixed_abs, tag = 'smem constant byte address 0x4 - core index']
  #allocation1 [shape = 'u32[72,128]{1,0:T(1,128)}', space=vmem, size = 0x9000, scoped, tag = 'internal scratch']
  #allocation2 [shape = 'f32[8,128]{1,0:T(8,128)}', space=vmem, size = 0x1000, scoped, tag = 'scratch operand']
  %s0 = inlined_call_operand.hbm [shape: f32[8,256], index: 0, kind: input, shape index: {}]
  %s1 = inlined_call_operand.vmem [shape: f32[8,1], index: 1, kind: output, shape index: {}]
  %s2 = sld [smem:[#allocation0]]
  $region26: #{tpu_custom_call.1} parent=0
    _
  %s4 = ssub.s32 1, %s2
  %s5 = scalar_select 0, %s4, %s2
  $region1: #{tpu_custom_call.1} parent=0
    #allocation3 [shape = 'u8[8192]{0}', space=vmem, size = 0x2000, scoped, tag = 'input window, operand 0, single buffered']
    #allocation4 [shape = 's32[1]{0}', space=sflag, size = 0x4, scoped, tag = 'scoped memory for tpu_custom_call.1']
    %6 = vsyncpa [#allocation4], 0
    // Predicated region
    $region2: #{tpu_custom_call.1} parent=1 // pred_check
      _
    $region3: #{tpu_custom_call.1} parent=1 // pred_check_branch
      %8 = sbr.rel (0) target = $region5
    $region4: #{tpu_custom_call.1} parent=1 // pred_region
      %10 = vsyncadd [#allocation4], 0
      %s12 = sshll.u32 %s0, 4
      %s13 = int_to_ptr.hbm [resolvable:$true] %s12
      %s14 = sshll.u32 [#allocation3], 4
      %s15 = int_to_ptr.vmem [resolvable:$true] %s14
      %17 = dma.hbm_to_vmem [thread:$0]  %s13, 256, %s15, [#allocation4]
    $region5: #{tpu_custom_call.1} parent=1 // pred_fallthru
      _
    // Predicated region
    $region6: #{tpu_custom_call.1} parent=1 // pred_check
      _
    $region7: #{tpu_custom_call.1} parent=1 // pred_check_branch
      %19 = sbr.rel (0) target = $region9
    $region8: #{tpu_custom_call.1} parent=1 // pred_region
      %21 = dma.done [#allocation4], 256
    $region9: #{tpu_custom_call.1} parent=1 // pred_fallthru
      _
    %p22 = scmp.eq.s32.totalorder 0, 0
    // Predicated region
    $region10: #{tpu_custom_call.1} parent=1 // pred_check
      %p23 = pneg %p22
    $region11: #{tpu_custom_call.1} parent=1 // pred_check_branch
      %25 = sbr.rel (%p23) target = $region13
    $region12: #{tpu_custom_call.1} parent=1 // pred_region
      %26 = vst [vmem:[#allocation2] sm:$0xff] 0.0
    $region13: #{tpu_custom_call.1} parent=1 // pred_fallthru
      _
    %v27 = vld [vmem:[#allocation3] sm:$0xff]
    %v28 = vld [vmem:[#allocation3 + $0x8] sm:$0xff]
    %v29 = vmax.f32 %v27, 1e-06
    %v30 = vmax.f32 %v28, 1e-06
    %v31 = vmul.f32 %v29, %v29
    %v32 = vmul.f32 %v30, %v30
    %v33 = vmul.f32 %v29, %v31
    %v34 = vmul.f32 %v30, %v32
    %v35 = vld [vmem:[#allocation2] sm:$0xff]
    %v36 = vadd.f32 %v35, %v33
    %v37 = vadd.f32 %v36, %v34
    %38 = vst [vmem:[#allocation2] sm:$0xff] %v37
    // Predicated region
    $region14: #{tpu_custom_call.1} parent=1 // pred_check
      %p39 = pneg %p22
    $region15: #{tpu_custom_call.1} parent=1 // pred_check_branch
      %41 = sbr.rel (%p39) target = $region17
    $region16: #{tpu_custom_call.1} parent=1 // pred_region
      %v42 = vld [vmem:[#allocation2] sm:$0xff]
      %43 = vadd.xlane.f32.xlu0 %v42
      %v44 = vpop.xlane.xlu0 %43
      %v45 = vmul.f32 %v44, 0.00390625
      %v46 = vpow.f32 %v45, 0.33333334
      %vm47 = vcmask 7168
      %48 = vst.msk [vmem:[%s1] sm:$0xff] %vm47, %v46
    $region17: #{tpu_custom_call.1} parent=1 // pred_fallthru
      _
    // Predicated region
    $region18: #{tpu_custom_call.1} parent=1 // pred_check
      _
    $region19: #{tpu_custom_call.1} parent=1 // pred_check_branch
      %50 = sbr.rel (0) target = $region21
    $region20: #{tpu_custom_call.1} parent=1 // pred_region
      _
    $region21: #{tpu_custom_call.1} parent=1 // pred_fallthru
      _
    // Predicated region
    $region22: #{tpu_custom_call.1} parent=1 // pred_check
      _
    $region23: #{tpu_custom_call.1} parent=1 // pred_check_branch
      %52 = sbr.rel (0) target = $region25
    $region24: #{tpu_custom_call.1} parent=1 // pred_region
      _
    $region25: #{tpu_custom_call.1} parent=1 // pred_fallthru
      _
    %53 = vsyncpa [#allocation4], 1

</llo_original>
